<compile_context>
chip_gen: v7x
topology: tpu7x:2x2x1
jax: 0.10.0
libtpu: 0.0.40
codegen_flags: <defaults>
</compile_context>

<pallas_src>
import jax
import jax.numpy as jnp
from jax.experimental import pallas as pl
from jax.experimental.pallas import tpu as pltpu


# --------------------------------------------------------------------------- #
# Kernel
# --------------------------------------------------------------------------- #
def _make_sdpa_kernel(has_mask, with_attn, inv_temperature, approx_reciprocal):
    """Builds a kernel specialized on (mask present?, attn output wanted?)."""

    def kernel(*refs):
        if has_mask:
            q_ref, k_ref, v_ref, m_ref = refs[0], refs[1], refs[2], refs[3]
            n_in = 4
        else:
            q_ref, k_ref, v_ref = refs[0], refs[1], refs[2]
            m_ref = None
            n_in = 3
        out_ref = refs[n_in]
        attn_ref = refs[n_in + 1] if with_attn else None

        q = q_ref[...]          # (bh, bq, Dk)
        k = k_ref[...]          # (bh, Lk, Dk)
        v = v_ref[...]          # (bh, Lk, Dv)

        # Fold 1/temperature into q before the MXU: bq*Dk native-dtype multiplies
        # instead of a bq*Lk f32 VPU pass, and it matches torch's q/temperature
        # pre-scaling exactly.
        q = q * jnp.asarray(inv_temperature, dtype=q.dtype)

        # scores = (q/temperature) @ k^T — native-dtype MXU operands, f32 acc,
        # no materialized transpose.
        scores = jnp.einsum("bqd,bkd->bqk", q, k,
                            preferred_element_type=jnp.float32)

        if has_mask:
            # Compact int8 mask; padding masks broadcast over the query axis.
            m = m_ref[...].astype(jnp.int32)
            scores = jnp.where(m == 0, jnp.float32(-1000000000.0), scores)

        # Numerically stable softmax in f32.
        mx = jnp.max(scores, axis=-1, keepdims=True)
        e = jnp.exp(scores - mx)
        denom = jnp.sum(e, axis=-1, keepdims=True)
        inv = pl.reciprocal(denom, approx=approx_reciprocal)  # exact by default
        attn = e * inv

        # output = attn @ v (MXU, native-dtype operands, f32 accumulation).
        out = jnp.einsum("bqk,bkd->bqd", attn.astype(v.dtype), v,
                         preferred_element_type=jnp.float32)

        out_ref[...] = out.astype(out_ref.dtype)
        if with_attn:
            attn_ref[...] = attn.astype(attn_ref.dtype)

    return kernel


# --------------------------------------------------------------------------- #
# Tiling / VMEM budgeting
# --------------------------------------------------------------------------- #
def _vmem_capacity_bytes():
    """Physical VMEM per core; conservative 64 MiB (v7x) fallback."""
    try:
        info = pltpu.get_tpu_info()
        cap = getattr(info, "vmem_capacity_bytes", None) or getattr(
            info, "vmem_bytes", None)
        if cap:
            return int(cap)
    except Exception:
        pass
    return 64 * 1024 * 1024


def _select_tiles(BH, Lq, Lk, Dk, Dv, elt_bytes, mask_per_q, has_mask,
                  with_attn, budget_bytes):
    """Pick (block_q, block_bh) so the double-buffered working set fits budget."""
    mask_bytes = 1  # int8 mask

    def step_bytes(bq, bh):
        mrows = bq if mask_per_q else 1
        io = (bq * Dk + Lk * (Dk + Dv) + bq * Dv) * elt_bytes
        if has_mask:
            io += mrows * Lk * mask_bytes
        if with_attn:
            io += bq * Lk * elt_bytes            # attn-probs writeback block
        io *= bh
        tmp = bh * bq * Lk * 4 * 2               # in-kernel f32 scores/exp temps
        return 2 * io + tmp                      # 2x: pipeline double-buffering

    def fits_q(bq):
        return step_bytes(bq, 1) <= budget_bytes

    # MXU-aligned query tile; prefer the whole Lq, then divisors of Lq
    # (no cdiv padding), then the largest aligned tile that fits.
    if fits_q(Lq):
        bq = Lq
    else:
        cands = [c for c in (2048, 1024, 512, 256, 128, 64, 32, 16, 8) if c < Lq]
        bq = next((c for c in cands if Lq % c == 0 and fits_q(c)), None)
        if bq is None:
            bq = next((c for c in cands if fits_q(c)), 8)

    # Batch*head tile: largest divisor of BH that fits, preferring an even
    # number of BH grid steps so v7x megacore can shard the BH axis evenly.
    divisors = [d for d in range(min(BH, 8), 0, -1)
                if BH % d == 0 and step_bytes(bq, d) <= budget_bytes]
    if not divisors:
        divisors = [1]
    even = [d for d in divisors if (BH // d) % 2 == 0]
    bh = even[0] if even else divisors[0]
    return bq, bh, step_bytes(bq, bh)


# --------------------------------------------------------------------------- #
# Public wrapper
# --------------------------------------------------------------------------- #
def scaled_dot_product_attention(q, k, v, temperature, mask=None, *,
                                 return_attn=True, approx_reciprocal=False):
    """q: (B,H,Lq,Dk), k: (B,H,Lk,Dk), v: (B,H,Lk,Dv),
    mask broadcastable to (B,H,Lq,Lk); zeros are masked out (or None).

    Returns (output (B,H,Lq,Dv), attn (B,H,Lq,Lk) or None) like the torch module
    (eval path — dropout is identity)."""
    B, H, Lq, Dk = q.shape
    Lk = k.shape[2]
    Dv = v.shape[3]
    BH = B * H

    qf = q.reshape(BH, Lq, Dk)
    kf = k.reshape(BH, Lk, Dk)
    vf = v.reshape(BH, Lk, Dv)

    has_mask = mask is not None
    if has_mask:
        mask = jnp.asarray(mask)
        # Keep the mask compact along the query axis when it does not depend on
        # it (the common padding-mask case), and store it as int8.
        mask_per_q = mask.ndim >= 2 and mask.shape[-2] == Lq and Lq > 1
        mrows = Lq if mask_per_q else 1
        mask_f = jnp.broadcast_to((mask != 0).astype(jnp.int8),
                                  (B, H, mrows, Lk)).reshape(BH, mrows, Lk)
    else:
        mask_per_q = False
        mask_f = None

    elt_bytes = jnp.dtype(q.dtype).itemsize
    vmem_cap = _vmem_capacity_bytes()
    budget = max(16 << 20, (3 * vmem_cap) // 8)   # ~24 MiB v7x, ~48 MiB v5e/v6e
    block_q, block_bh, est_bytes = _select_tiles(
        BH, Lq, Lk, Dk, Dv, elt_bytes, mask_per_q, has_mask, return_attn, budget)

    grid = (BH // block_bh, pl.cdiv(Lq, block_q))

    in_specs = [
        pl.BlockSpec((block_bh, block_q, Dk), lambda i, j: (i, j, 0)),  # q
        pl.BlockSpec((block_bh, Lk, Dk), lambda i, j: (i, 0, 0)),       # k (resident across Lq)
        pl.BlockSpec((block_bh, Lk, Dv), lambda i, j: (i, 0, 0)),       # v (resident across Lq)
    ]
    operands = [qf, kf, vf]
    if has_mask:
        mrows_blk = block_q if mask_per_q else 1
        midx = (lambda i, j: (i, j, 0)) if mask_per_q else (lambda i, j: (i, 0, 0))
        in_specs.append(pl.BlockSpec((block_bh, mrows_blk, Lk), midx))
        operands.append(mask_f)

    out_specs = [pl.BlockSpec((block_bh, block_q, Dv), lambda i, j: (i, j, 0))]
    out_shape = [jax.ShapeDtypeStruct((BH, Lq, Dv), q.dtype)]
    if return_attn:
        out_specs.append(pl.BlockSpec((block_bh, block_q, Lk),
                                      lambda i, j: (i, j, 0)))
        out_shape.append(jax.ShapeDtypeStruct((BH, Lq, Lk), q.dtype))

    kernel = _make_sdpa_kernel(has_mask, return_attn,
                               float(1.0 / temperature), approx_reciprocal)

    grid_spec = pltpu.PrefetchScalarGridSpec(
        num_scalar_prefetch=0, grid=grid,
        in_specs=in_specs, out_specs=out_specs)

    # Generation-aware VMEM limit (~3/4 of physical), always >= working set.
    vmem_limit = int(min(max(est_bytes + (16 << 20), 32 << 20),
                         (3 * vmem_cap) // 4))
    vmem_limit = max(vmem_limit, est_bytes + (4 << 20))

    results = pl.pallas_call(
        kernel,
        out_shape=tuple(out_shape),
        grid_spec=grid_spec,
        compiler_params=pltpu.CompilerParams(
            # BH axis "parallel": v7x megacore shards heads (each core keeps its
            # K/V resident across the Lq loop); Lq axis "arbitrary".
            dimension_semantics=("parallel", "arbitrary"),
            vmem_limit_bytes=vmem_limit),
    )(*operands)

    out = results[0].reshape(B, H, Lq, Dv)
    attn = results[1].reshape(B, H, Lq, Lk) if return_attn else None
    return out, attn


# --------------------------------------------------------------------------- #
# Reference + self-test
# --------------------------------------------------------------------------- #
def _reference(q, k, v, temperature, mask=None):
    scores = jnp.einsum("bhqd,bhkd->bhqk", q / temperature, k)
    if mask is not None:
        scores = jnp.where(mask == 0, -1000000000.0, scores)
    attn = jax.nn.softmax(scores, axis=-1)
    out = jnp.einsum("bhqk,bhkd->bhqd", attn, v)
    return out, attn


if __name__ == "__main__":
    # Small shapes consistent with the module: batch=2, heads=4, seq=8, head_dim=32.
    B, H, L, D = 2, 4, 8, 32
    temperature = float(D) ** 0.5

    key = jax.random.PRNGKey(0)
    kq, kk, kv, km = jax.random.split(key, 4)
    q = jax.random.normal(kq, (B, H, L, D), dtype=jnp.float32)
    k = jax.random.normal(kk, (B, H, L, D), dtype=jnp.float32)
    v = jax.random.normal(kv, (B, H, L, D), dtype=jnp.float32)
    # Broadcastable padding-style mask: (B, 1, 1, L); zeros mean "masked".
    mask = (jax.random.uniform(km, (B, 1, 1, L)) > 0.2).astype(jnp.int32)

    # --- masked, both outputs (module semantics) ---
    out, attn = scaled_dot_product_attention(q, k, v, temperature, mask=mask)
    out, attn = jax.block_until_ready((out, attn))
    ref_out, ref_attn = _reference(q, k, v, temperature, mask=mask)

    assert out.shape == (B, H, L, D) and attn.shape == (B, H, L, L)
    # Tolerance covers the MXU's bf16-class default precision on the f32 path.
    assert jnp.allclose(out, ref_out, atol=1e-2, rtol=1e-2)
    assert jnp.allclose(attn, ref_attn, atol=1e-2, rtol=1e-2)

    # --- unmasked, output-only variant (no mask DMA/select, no attn writeback) ---
    out2, attn2 = scaled_dot_product_attention(q, k, v, temperature, mask=None,
                                               return_attn=False)
    out2 = jax.block_until_ready(out2)
    ref_out2, _ = _reference(q, k, v, temperature, mask=None)
    assert attn2 is None
    assert jnp.allclose(out2, ref_out2, atol=1e-2, rtol=1e-2)

    # --- bf16 path: native-dtype MXU operands, f32 softmax ---
    qb, kb, vb = (x.astype(jnp.bfloat16) for x in (q, k, v))
    out_b, attn_b = scaled_dot_product_attention(qb, kb, vb, temperature, mask=mask)
    out_b, attn_b = jax.block_until_ready((out_b, attn_b))
    assert out_b.dtype == jnp.bfloat16 and attn_b.dtype == jnp.bfloat16
    assert jnp.allclose(out_b.astype(jnp.float32), ref_out, atol=1e-1, rtol=1e-1)

    print("KERNEL_OK")
</pallas_src>

<mosaic_0001>
module attributes {stable_mosaic.version = 11 : i64} {
  func.func @kernel(%arg0: i32, %arg1: i32, %arg2: memref<4x8x32xf32, #tpu.memory_space<vmem>>, %arg3: memref<4x8x32xf32, #tpu.memory_space<vmem>>, %arg4: memref<4x8x32xf32, #tpu.memory_space<vmem>>, %arg5: memref<4x1x8xi8, #tpu.memory_space<vmem>>, %arg6: memref<4x8x32xf32, #tpu.memory_space<vmem>>, %arg7: memref<4x8x8xf32, #tpu.memory_space<vmem>>) attributes {dimension_semantics = [#tpu.dimension_semantics<parallel>, #tpu.dimension_semantics<arbitrary>], iteration_bounds = array<i64: 2, 1>, scalar_prefetch = 0 : i64, scratch_operands = 0 : i64, tpu.core_type = #tpu.core_type<tc>, window_params = [{transform_indices = @transform_0, window_bounds = array<i64: 4, 8, 32>}, {transform_indices = @transform_1, window_bounds = array<i64: 4, 8, 32>}, {transform_indices = @transform_2, window_bounds = array<i64: 4, 8, 32>}, {transform_indices = @transform_3, window_bounds = array<i64: 4, 1, 8>}, {transform_indices = @transform_4, window_bounds = array<i64: 4, 8, 32>}, {transform_indices = @transform_5, window_bounds = array<i64: 4, 8, 8>}]} {
    %c0 = arith.constant 0 : index
    %c0_0 = arith.constant 0 : index
    %c0_1 = arith.constant 0 : index
    %0 = vector.load %arg2[%c0, %c0_0, %c0_1] : memref<4x8x32xf32, #tpu.memory_space<vmem>>, vector<4x8x32xf32>
    %c0_2 = arith.constant 0 : index
    %c0_3 = arith.constant 0 : index
    %c0_4 = arith.constant 0 : index
    %1 = vector.load %arg3[%c0_2, %c0_3, %c0_4] : memref<4x8x32xf32, #tpu.memory_space<vmem>>, vector<4x8x32xf32>
    %c0_5 = arith.constant 0 : index
    %c0_6 = arith.constant 0 : index
    %c0_7 = arith.constant 0 : index
    %2 = vector.load %arg4[%c0_5, %c0_6, %c0_7] : memref<4x8x32xf32, #tpu.memory_space<vmem>>, vector<4x8x32xf32>
    %cst = arith.constant 0.176776692 : f32
    %3 = vector.broadcast %cst : f32 to vector<4x8x32xf32>
    %4 = arith.mulf %0, %3 : vector<4x8x32xf32>
    "tpu.trace_start"() <{level = 10 : i32, message = "bqd,bkd->bqk"}> : () -> ()
    %cst_8 = arith.constant dense<0.000000e+00> : vector<4x8x8xf32>
    %5 = tpu.matmul %4, %1, %cst_8 {dimension_numbers = #tpu.dot_dimension_numbers<[2], [2], [1], [1], [0, 0, 0, 1, 1, 1], [0], [0]>} : vector<4x8x32xf32>, vector<4x8x32xf32>, vector<4x8x8xf32> -> vector<4x8x8xf32>
    "tpu.trace_stop"() : () -> ()
    %c0_9 = arith.constant 0 : index
    %c0_10 = arith.constant 0 : index
    %c0_11 = arith.constant 0 : index
    %6 = vector.load %arg5[%c0_9, %c0_10, %c0_11] : memref<4x1x8xi8, #tpu.memory_space<vmem>>, vector<4x1x8xi8>
    %7 = arith.extsi %6 : vector<4x1x8xi8> to vector<4x1x8xi32>
    %c0_i32 = arith.constant 0 : i32
    %8 = vector.broadcast %c0_i32 : i32 to vector<4x1x8xi32>
    %9 = arith.cmpi eq, %7, %8 : vector<4x1x8xi32>
    %cst_12 = arith.constant -1.000000e+09 : f32
    %10 = vector.shape_cast %9 : vector<4x1x8xi1> to vector<4x1x8xi1>
    %11 = vector.broadcast %10 : vector<4x1x8xi1> to vector<4x8x8xi1>
    %12 = vector.broadcast %cst_12 : f32 to vector<4x8x8xf32>
    %13 = arith.select %11, %12, %5 : vector<4x8x8xi1>, vector<4x8x8xf32>
    %cst_13 = arith.constant dense<0xFF800000> : vector<4x8xf32>
    %14 = vector.multi_reduction <maximumf>, %13, %cst_13 [2] : vector<4x8x8xf32> to vector<4x8xf32>
    %15 = vector.shape_cast %14 : vector<4x8xf32> to vector<4x8x1xf32>
    %16 = vector.broadcast %15 : vector<4x8x1xf32> to vector<4x8x8xf32>
    %17 = arith.subf %13, %16 : vector<4x8x8xf32>
    %18 = math.exp %17 : vector<4x8x8xf32>
    %cst_14 = arith.constant dense<0.000000e+00> : vector<4x8xf32>
    %19 = vector.multi_reduction <add>, %18, %cst_14 [2] : vector<4x8x8xf32> to vector<4x8xf32>
    %20 = vector.shape_cast %19 : vector<4x8xf32> to vector<4x8x1xf32>
    %21 = tpu.reciprocal %20 : vector<4x8x1xf32> -> vector<4x8x1xf32>
    %22 = vector.broadcast %21 : vector<4x8x1xf32> to vector<4x8x8xf32>
    %23 = arith.mulf %18, %22 : vector<4x8x8xf32>
    "tpu.trace_start"() <{level = 10 : i32, message = "bqk,bkd->bqd"}> : () -> ()
    %cst_15 = arith.constant dense<0.000000e+00> : vector<4x8x32xf32>
    %24 = tpu.matmul %23, %2, %cst_15 {dimension_numbers = #tpu.dot_dimension_numbers<[2], [1], [1], [2], [0, 0, 0, 1, 1, 2], [0], [0]>} : vector<4x8x8xf32>, vector<4x8x32xf32>, vector<4x8x32xf32> -> vector<4x8x32xf32>
    "tpu.trace_stop"() : () -> ()
    %c0_16 = arith.constant 0 : index
    %c0_17 = arith.constant 0 : index
    %c0_18 = arith.constant 0 : index
    %25 = vector.load %arg6[%c0_16, %c0_17, %c0_18] : memref<4x8x32xf32, #tpu.memory_space<vmem>>, vector<4x8x32xf32>
    tpu.vector_store %arg6[%c0_16, %c0_17, %c0_18], %24 {strides = array<i32>} : memref<4x8x32xf32, #tpu.memory_space<vmem>>, vector<4x8x32xf32>,
    %c0_19 = arith.constant 0 : index
    %c0_20 = arith.constant 0 : index
    %c0_21 = arith.constant 0 : index
    %26 = vector.load %arg7[%c0_19, %c0_20, %c0_21] : memref<4x8x8xf32, #tpu.memory_space<vmem>>, vector<4x8x8xf32>
    tpu.vector_store %arg7[%c0_19, %c0_20, %c0_21], %23 {strides = array<i32>} : memref<4x8x8xf32, #tpu.memory_space<vmem>>, vector<4x8x8xf32>,
    return
  }
  func.func @transform_0(%arg0: i32, %arg1: i32) -> (i32, i32, i32) {
    %c0_i32 = arith.constant 0 : i32
    %c0_i32_0 = arith.constant 0 : i32
    return %arg0, %arg1, %c0_i32 : i32, i32, i32
  }
  func.func @transform_1(%arg0: i32, %arg1: i32) -> (i32, i32, i32) {
    %c0_i32 = arith.constant 0 : i32
    %c0_i32_0 = arith.constant 0 : i32
    %c0_i32_1 = arith.constant 0 : i32
    return %arg0, %c0_i32, %c0_i32_0 : i32, i32, i32
  }
  func.func @transform_2(%arg0: i32, %arg1: i32) -> (i32, i32, i32) {
    %c0_i32 = arith.constant 0 : i32
    %c0_i32_0 = arith.constant 0 : i32
    %c0_i32_1 = arith.constant 0 : i32
    return %arg0, %c0_i32, %c0_i32_0 : i32, i32, i32
  }
  func.func @transform_3(%arg0: i32, %arg1: i32) -> (i32, i32, i32) {
    %c0_i32 = arith.constant 0 : i32
    %c0_i32_0 = arith.constant 0 : i32
    %c0_i32_1 = arith.constant 0 : i32
    return %arg0, %c0_i32, %c0_i32_0 : i32, i32, i32
  }
  func.func @transform_4(%arg0: i32, %arg1: i32) -> (i32, i32, i32) {
    %c0_i32 = arith.constant 0 : i32
    %c0_i32_0 = arith.constant 0 : i32
    return %arg0, %arg1, %c0_i32 : i32, i32, i32
  }
  func.func @transform_5(%arg0: i32, %arg1: i32) -> (i32, i32, i32) {
    %c0_i32 = arith.constant 0 : i32
    %c0_i32_0 = arith.constant 0 : i32
    return %arg0, %arg1, %c0_i32 : i32, i32, i32
  }
}

</mosaic_0001>

<llo_original>
// kernel: tpu_custom_call.1
$region0: #{tpu_custom_call.1}
  #allocation0 [shape = 'u32[]', space=smem, size = 0x4, offset = 0x4, fixed_abs, tag = 'smem constant byte address 0x4 - core index']
  #allocation1 [shape = 'u32[144,128]{1,0:T(1,128)}', space=vmem, size = 0x12000, scoped, tag = 'internal scratch']
  %s0 = inlined_call_operand.hbm [shape: f32[8,8,32], index: 0, kind: input, shape index: {}]
  %s1 = inlined_call_operand.hbm [shape: f32[8,8,32], index: 1, kind: input, shape index: {}]
  %s2 = inlined_call_operand.hbm [shape: f32[8,8,32], index: 2, kind: input, shape index: {}]
  %s3 = inlined_call_operand.vmem [shape: s8[8,1,8], index: 3, kind: input, shape index: {}]
  %s4 = inlined_call_operand.hbm [shape: f32[8,8,32], index: 4, kind: output, shape index: {0}]
  %s5 = inlined_call_operand.hbm [shape: f32[8,8,8], index: 5, kind: output, shape index: {1}]
  %6 = xla_tuple %s4, %s5
  %s7 = sld [smem:[#allocation0]]
  $region69: #{tpu_custom_call.1} parent=0
    _
  %s9 = ssub.s32 1, %s7
  %s10 = scalar_select 0, %s9, %s7
  $region1: #{tpu_custom_call.1} parent=0
    #allocation2 [shape = 'u8[32768]{0}', space=vmem, size = 0x8000, scoped, tag = 'input window, operand 0']
    #allocation3 [shape = 's32[2]{0}', space=sflag, size = 0x8, scoped, tag = 'scoped memory for tpu_custom_call.1']
    #allocation4 [shape = 's32[2]{0}', space=sflag, size = 0x8, scoped, tag = 'scoped memory for tpu_custom_call.1']
    #allocation5 [shape = 'u8[32768]{0}', space=vmem, size = 0x8000, scoped, tag = 'input window, operand 1']
    #allocation6 [shape = 's32[2]{0}', space=sflag, size = 0x8, scoped, tag = 'scoped memory for tpu_custom_call.1']
    #allocation7 [shape = 'u8[32768]{0}', space=vmem, size = 0x8000, scoped, tag = 'input window, operand 2']
    #allocation8 [shape = 'u8[32768]{0}', space=vmem, size = 0x8000, scoped, tag = 'output window, operand 0']
    #allocation9 [shape = 'u8[32768]{0}', space=vmem, size = 0x8000, scoped, tag = 'output window, operand 1']
    #allocation10 [shape = 's32[2]{0}', space=sflag, size = 0x8, scoped, tag = 'scoped memory for tpu_custom_call.1']
    %11 = vsyncpa [#allocation3], 0
    %s12 = scalar_lea.sflag [#allocation3], 1
    %13 = vsyncpa %s12, 0
    %14 = vsyncpa [#allocation6], 0
    %s15 = scalar_lea.sflag [#allocation6], 1
    %16 = vsyncpa %s15, 0
    %17 = vsyncpa [#allocation4], 0
    %s18 = scalar_lea.sflag [#allocation4], 1
    %19 = vsyncpa %s18, 0
    %20 = vsyncpa [#allocation10], 0
    %s21 = scalar_lea.sflag [#allocation10], 1
    %22 = vsyncpa %s21, 0
    loop: start=0, step=1, limit=4
    $region2: #{tpu_custom_call.1} parent=1 // loop_pre_header
      _
    $region3: #{tpu_custom_call.1} parent=1 // loop_header
      %s24 = sphi 0, %s28
      %p25 = scmp.ge.s32.totalorder %s24, 4
      %s31 = sphi 0, %s43
      %s32 = sphi 0, %s39
      %s33 = sphi 0, %s31
      %s34 = sphi 0, %s32
      %s35 = sphi 0, %s33
      %s36 = sphi 0, %s34
      %s48 = sphi 0, %s50
      %s51 = sphi 0, %s48
      %s52 = sphi 0, %s51
      %s68 = sphi 0, %s52
      %s74 = sphi 0, %s76
      %s77 = sphi 0, %s74
      %s78 = sphi 0, %s77
      %s94 = sphi 0, %s78
      %s100 = sphi 0, %s102
      %s103 = sphi 0, %s100
      %s104 = sphi 0, %s103
      %s120 = sphi 0, %s104
      %s126 = sphi 0, %s128
      %s129 = sphi 0, %s126
      %s130 = sphi 0, %s129
      %s146 = sphi 0, %s130
      %s154 = sphi 0, %s156
      %s157 = sphi 0, %s154
      %s158 = sphi 0, %s157
      %s174 = sphi 0, %s158
      %s182 = sphi 0, %s184
      %s185 = sphi 0, %s182
      %s186 = sphi 0, %s185
      %s202 = sphi 0, %s186
    $region4: #{tpu_custom_call.1} parent=1 // loop_header_branch
      %27 = sbr.rel (%p25) target = $region8
    $region5: #{tpu_custom_call.1} parent=1 // loop_body
      %s29 = ssub.s32 %s24, 1
      %s30 = ssub.s32 %s24, 2
      %s37 = sadd.s32 1, %s32
      %p38 = scmp.ge.s32.totalorder %s37, 1
      %s39 = scalar_select %p38, 0, %s37
      %s40 = sadd.s32 1, %s31
      %s41 = scalar_select %p38, %s40, %s31
      %p42 = scmp.ge.s32.totalorder %s41, 2
      %s43 = scalar_select %p42, 0, %s41
      %s44 = ssub.s32 %s31, %s43
      %s45 = ssub.s32 %s32, %s39
      %s46 = sor.u32 %s44, %s45
      %p47 = scmp.eq.s32.totalorder %s46, 0
      %s49 = sadd.s32 %s48, 1
      %s50 = scalar_select %p47, %s48, %s49
      %p53 = pneg %p47
      %p54 = scmp.eq.s32.totalorder %s24, 1
      %p55 = por %p53, %p54
      %p56 = scmp.ne.s32.totalorder %s48, %s51
      %p57 = scmp.eq.s32.totalorder %s24, 0
      %p58 = por %p56, %p57
      %p59 = scmp.ne.s32.totalorder %s48, %s51
      %p60 = scmp.eq.s32.totalorder %s29, 1
      %p61 = por %p59, %p60
      %p62 = scmp.ne.s32.totalorder %s51, %s52
      %p63 = scmp.eq.s32.totalorder %s29, 0
      %p64 = por %p62, %p63
      %p65 = scmp.ne.s32.totalorder %s51, %s52
      %p66 = scmp.eq.s32.totalorder %s30, 1
      %p67 = por %p65, %p66
      %p69 = scmp.ne.s32.totalorder %s52, %s68
      %p70 = scmp.eq.s32.totalorder %s30, 0
      %p71 = por %p69, %p70
      %s72 = ssub.s32 %s31, %s43
      %p73 = scmp.eq.s32.totalorder %s72, 0
      %s75 = sadd.s32 %s74, 1
      %s76 = scalar_select %p73, %s74, %s75
      %p79 = pneg %p73
      %p80 = scmp.eq.s32.totalorder %s24, 1
      %p81 = por %p79, %p80
      %p82 = scmp.ne.s32.totalorder %s74, %s77
      %p83 = scmp.eq.s32.totalorder %s24, 0
      %p84 = por %p82, %p83
      %p85 = scmp.ne.s32.totalorder %s74, %s77
      %p86 = scmp.eq.s32.totalorder %s29, 1
      %p87 = por %p85, %p86
      %p88 = scmp.ne.s32.totalorder %s77, %s78
      %p89 = scmp.eq.s32.totalorder %s29, 0
      %p90 = por %p88, %p89
      %p91 = scmp.ne.s32.totalorder %s77, %s78
      %p92 = scmp.eq.s32.totalorder %s30, 1
      %p93 = por %p91, %p92
      %p95 = scmp.ne.s32.totalorder %s78, %s94
      %p96 = scmp.eq.s32.totalorder %s30, 0
      %p97 = por %p95, %p96
      %s98 = ssub.s32 %s31, %s43
      %p99 = scmp.eq.s32.totalorder %s98, 0
      %s101 = sadd.s32 %s100, 1
      %s102 = scalar_select %p99, %s100, %s101
      %p105 = pneg %p99
      %p106 = scmp.eq.s32.totalorder %s24, 1
      %p107 = por %p105, %p106
      %p108 = scmp.ne.s32.totalorder %s100, %s103
      %p109 = scmp.eq.s32.totalorder %s24, 0
      %p110 = por %p108, %p109
      %p111 = scmp.ne.s32.totalorder %s100, %s103
      %p112 = scmp.eq.s32.totalorder %s29, 1
      %p113 = por %p111, %p112
      %p114 = scmp.ne.s32.totalorder %s103, %s104
      %p115 = scmp.eq.s32.totalorder %s29, 0
      %p116 = por %p114, %p115
      %p117 = scmp.ne.s32.totalorder %s103, %s104
      %p118 = scmp.eq.s32.totalorder %s30, 1
      %p119 = por %p117, %p118
      %p121 = scmp.ne.s32.totalorder %s104, %s120
      %p122 = scmp.eq.s32.totalorder %s30, 0
      %p123 = por %p121, %p122
      %s124 = ssub.s32 %s31, %s43
      %p125 = scmp.eq.s32.totalorder %s124, 0
      %s127 = sadd.s32 %s126, 1
      %s128 = scalar_select %p125, %s126, %s127
      %p131 = pneg %p125
      %p132 = scmp.eq.s32.totalorder %s24, 1
      %p133 = por %p131, %p132
      %p134 = scmp.ne.s32.totalorder %s126, %s129
      %p135 = scmp.eq.s32.totalorder %s24, 0
      %p136 = por %p134, %p135
      %p137 = scmp.ne.s32.totalorder %s126, %s129
      %p138 = scmp.eq.s32.totalorder %s29, 1
      %p139 = por %p137, %p138
      %p140 = scmp.ne.s32.totalorder %s129, %s130
      %p141 = scmp.eq.s32.totalorder %s29, 0
      %p142 = por %p140, %p141
      %p143 = scmp.ne.s32.totalorder %s129, %s130
      %p144 = scmp.eq.s32.totalorder %s30, 1
      %p145 = por %p143, %p144
      %p147 = scmp.ne.s32.totalorder %s130, %s146
      %p148 = scmp.eq.s32.totalorder %s30, 0
      %p149 = por %p147, %p148
      %s150 = ssub.s32 %s31, %s43
      %s151 = ssub.s32 %s32, %s39
      %s152 = sor.u32 %s150, %s151
      %p153 = scmp.eq.s32.totalorder %s152, 0
      %s155 = sadd.s32 %s154, 1
      %s156 = scalar_select %p153, %s154, %s155
      %p159 = pneg %p153
      %p160 = scmp.eq.s32.totalorder %s24, 1
      %p161 = por %p159, %p160
      %p162 = scmp.ne.s32.totalorder %s154, %s157
      %p163 = scmp.eq.s32.totalorder %s24, 0
      %p164 = por %p162, %p163
      %p165 = scmp.ne.s32.totalorder %s154, %s157
      %p166 = scmp.eq.s32.totalorder %s29, 1
      %p167 = por %p165, %p166
      %p168 = scmp.ne.s32.totalorder %s157, %s158
      %p169 = scmp.eq.s32.totalorder %s29, 0
      %p170 = por %p168, %p169
      %p171 = scmp.ne.s32.totalorder %s157, %s158
      %p172 = scmp.eq.s32.totalorder %s30, 1
      %p173 = por %p171, %p172
      %p175 = scmp.ne.s32.totalorder %s158, %s174
      %p176 = scmp.eq.s32.totalorder %s30, 0
      %p177 = por %p175, %p176
      %s178 = ssub.s32 %s31, %s43
      %s179 = ssub.s32 %s32, %s39
      %s180 = sor.u32 %s178, %s179
      %p181 = scmp.eq.s32.totalorder %s180, 0
      %s183 = sadd.s32 %s182, 1
      %s184 = scalar_select %p181, %s182, %s183
      %p187 = pneg %p181
      %p188 = scmp.eq.s32.totalorder %s24, 1
      %p189 = por %p187, %p188
      %p190 = scmp.ne.s32.totalorder %s182, %s185
      %p191 = scmp.eq.s32.totalorder %s24, 0
      %p192 = por %p190, %p191
      %p193 = scmp.ne.s32.totalorder %s182, %s185
      %p194 = scmp.eq.s32.totalorder %s29, 1
      %p195 = por %p193, %p194
      %p196 = scmp.ne.s32.totalorder %s185, %s186
      %p197 = scmp.eq.s32.totalorder %s29, 0
      %p198 = por %p196, %p197
      %p199 = scmp.ne.s32.totalorder %s185, %s186
      %p200 = scmp.eq.s32.totalorder %s30, 1
      %p201 = por %p199, %p200
      %p203 = scmp.ne.s32.totalorder %s186, %s202
      %p204 = scmp.eq.s32.totalorder %s30, 0
      %p205 = por %p203, %p204
      %p206 = scmp.le.s32.totalorder 1, %s24
      %p207 = scmp.lt.s32.totalorder %s24, 3
      %p208 = pnand %p206, %p207
      %p209 = pneg %p208
      // Predicated region
      $region9: #{tpu_custom_call.1} parent=5 // pred_check
        _
      $region10: #{tpu_custom_call.1} parent=5 // pred_check_branch
        %211 = sbr.rel (%p208) target = $region12
      $region11: #{tpu_custom_call.1} parent=5 // pred_region
        %s212 = ssub.s32 %s24, 1
      $region12: #{tpu_custom_call.1} parent=5 // pred_fallthru
        _
      %p213 = scmp.lt.s32.totalorder %s24, 2
      // Predicated region
      $region13: #{tpu_custom_call.1} parent=5 // pred_check
        %p214 = pneg %p213
      $region14: #{tpu_custom_call.1} parent=5 // pred_check_branch
        %216 = sbr.rel (%p214) target = $region16
      $region15: #{tpu_custom_call.1} parent=5 // pred_region
        // Predicated region
        $region17: #{tpu_custom_call.1} parent=15 // pred_check
          %p217 = pneg %p58
        $region18: #{tpu_custom_call.1} parent=15 // pred_check_branch
          %219 = sbr.rel (%p217) target = $region20
        $region19: #{tpu_custom_call.1} parent=15 // pred_region
          %s220 = sand.u32 %s48, 1
          %s221 = scalar_lea.sflag [#allocation3], %s220
          %s222 = sand.u32 %s48, 1
          %s223 = smul.addr %s222, 32
          %s224 = scalar_lea.vmem [#allocation2], %s223
          %s225 = smul.u32 4, %s31
          %s227 = ssub.s32 512, 512
          %228 = vsyncadd %s221, %s227
          %s229 = sadd.s32 %s32, %s225
          %s230 = smul.addr %s229, 128
          %s231 = scalar_lea.hbm %s0, %s230
          %s232 = sshll.u32 %s224, 4
          %s233 = int_to_ptr.vmem [resolvable:$true] %s232
          %238 = dma.hbm_to_vmem [thread:$0]  %s231, 512, %s233, %s221, 128, 128, 8
        $region20: #{tpu_custom_call.1} parent=15 // pred_fallthru
          _
        // Predicated region
        $region21: #{tpu_custom_call.1} parent=15 // pred_check
          %p239 = pneg %p84
        $region22: #{tpu_custom_call.1} parent=15 // pred_check_branch
          %241 = sbr.rel (%p239) target = $region24
        $region23: #{tpu_custom_call.1} parent=15 // pred_region
          %s242 = sand.u32 %s24, 1
          %s243 = scalar_lea.sflag [#allocation6], %s242
          %s244 = sand.u32 %s74, 1
          %s245 = smul.addr %s244, 32
          %s246 = scalar_lea.vmem [#allocation5], %s245
          %s247 = smul.u32 4, %s31
          %s249 = ssub.s32 512, 512
          %250 = vsyncadd %s243, %s249
          %s251 = smul.addr %s247, 128
          %s252 = scalar_lea.hbm %s1, %s251
          %s253 = sshll.u32 %s246, 4
          %s254 = int_to_ptr.vmem [resolvable:$true] %s253
          %259 = dma.hbm_to_vmem [thread:$0]  %s252, 512, %s254, %s243, 128, 128, 8
        $region24: #{tpu_custom_call.1} parent=15 // pred_fallthru
          _
        // Predicated region
        $region25: #{tpu_custom_call.1} parent=15 // pred_check
          %p260 = pneg %p110
        $region26: #{tpu_custom_call.1} parent=15 // pred_check_branch
          %262 = sbr.rel (%p260) target = $region28
        $region27: #{tpu_custom_call.1} parent=15 // pred_region
          %s263 = sand.u32 %s24, 1
          %s264 = scalar_lea.sflag [#allocation6], %s263
          %s265 = sand.u32 %s100, 1
          %s266 = smul.addr %s265, 32
          %s267 = scalar_lea.vmem [#allocation7], %s266
          %s268 = smul.u32 4, %s31
          %s270 = ssub.s32 512, 512
          %271 = vsyncadd %s264, %s270
          %s272 = smul.addr %s268, 128
          %s273 = scalar_lea.hbm %s2, %s272
          %s274 = sshll.u32 %s267, 4
          %s275 = int_to_ptr.vmem [resolvable:$true] %s274
          %280 = dma.hbm_to_vmem [thread:$0]  %s273, 512, %s275, %s264, 128, 128, 8
        $region28: #{tpu_custom_call.1} parent=15 // pred_fallthru
          _
        // Predicated region
        $region29: #{tpu_custom_call.1} parent=15 // pred_check
          %p281 = pneg %p136
        $region30: #{tpu_custom_call.1} parent=15 // pred_check_branch
          %283 = sbr.rel (%p281) target = $region32
        $region31: #{tpu_custom_call.1} parent=15 // pred_region
          %s284 = smul.u32 4, %s31
          %p285 = scmp.lt.s32.totalorder %s284, 7
          %s286 = scalar_select %p285, %s284, 7
          %s287 = scalar_lea.vmem %s3, %s286
          %s288 = smul.u32 4, %s31
        $region32: #{tpu_custom_call.1} parent=15 // pred_fallthru
          _
      $region16: #{tpu_custom_call.1} parent=5 // pred_fallthru
        _
      %p289 = scmp.le.s32.totalorder 1, %s24
      %p290 = scmp.lt.s32.totalorder %s24, 3
      %p291 = pnand %p289, %p290
      %p292 = pneg %p291
      // Predicated region
      $region33: #{tpu_custom_call.1} parent=5 // pred_check
        _
      $region34: #{tpu_custom_call.1} parent=5 // pred_check_branch
        %294 = sbr.rel (%p291) target = $region36
      $region35: #{tpu_custom_call.1} parent=5 // pred_region
        %s295 = ssub.s32 %s24, 1
        %s296 = sand.u32 %s51, 1
        %s297 = scalar_lea.sflag [#allocation3], %s296
        %s298 = sand.u32 %s51, 1
        %s299 = smul.addr %s298, 32
        %s300 = scalar_lea.vmem [#allocation2], %s299
        // Predicated region
        $region37: #{tpu_custom_call.1} parent=35 // pred_check
          %p301 = pneg %p64
        $region38: #{tpu_custom_call.1} parent=35 // pred_check_branch
          %303 = sbr.rel (%p301) target = $region40
        $region39: #{tpu_custom_call.1} parent=35 // pred_region
          %304 = dma.done %s297, 512
        $region40: #{tpu_custom_call.1} parent=35 // pred_fallthru
          _
        %s305 = sand.u32 %s29, 1
        %s306 = scalar_lea.sflag [#allocation6], %s305
        %s307 = sand.u32 %s77, 1
        %s308 = smul.addr %s307, 32
        %s309 = scalar_lea.vmem [#allocation5], %s308
        // Predicated region
        $region41: #{tpu_custom_call.1} parent=35 // pred_check
          %p310 = pneg %p90
        $region42: #{tpu_custom_call.1} parent=35 // pred_check_branch
          %312 = sbr.rel (%p310) target = $region44
        $region43: #{tpu_custom_call.1} parent=35 // pred_region
          %313 = dma.done %s306, 512
        $region44: #{tpu_custom_call.1} parent=35 // pred_fallthru
          _
        %s314 = sand.u32 %s29, 1
        %s315 = scalar_lea.sflag [#allocation6], %s314
        %s316 = sand.u32 %s103, 1
        %s317 = smul.addr %s316, 32
        %s318 = scalar_lea.vmem [#allocation7], %s317
        // Predicated region
        $region45: #{tpu_custom_call.1} parent=35 // pred_check
          %p319 = pneg %p116
        $region46: #{tpu_custom_call.1} parent=35 // pred_check_branch
          %321 = sbr.rel (%p319) target = $region48
        $region47: #{tpu_custom_call.1} parent=35 // pred_region
          %322 = dma.done %s315, 512
        $region48: #{tpu_custom_call.1} parent=35 // pred_fallthru
          _
        %s323 = sand.u32 %s51, 1
        %s324 = scalar_lea.sflag [#allocation3], %s323
        %s325 = sand.u32 %s51, 1
        %s326 = smul.addr %s325, 32
        %s327 = scalar_lea.vmem [#allocation2], %s326
        %p328 = pneg %p64
        %p329 = pneg %p61
        %s330 = sand.u32 %s29, 1
        %s331 = scalar_lea.sflag [#allocation6], %s330
        %s332 = sand.u32 %s77, 1
        %s333 = smul.addr %s332, 32
        %s334 = scalar_lea.vmem [#allocation5], %s333
        %p335 = pneg %p90
        %p336 = pneg %p87
        %s337 = sand.u32 %s29, 1
        %s338 = scalar_lea.sflag [#allocation6], %s337
        %s339 = sand.u32 %s103, 1
        %s340 = smul.addr %s339, 32
        %s341 = scalar_lea.vmem [#allocation7], %s340
        %p342 = pneg %p116
        %p343 = pneg %p113
        %s344 = smul.u32 4, %s33
        %p345 = scmp.lt.s32.totalorder %s344, 7
        %s346 = scalar_select %p345, %s344, 7
        %s347 = scalar_lea.vmem %s3, %s346
        %p348 = pneg %p142
        %p349 = pneg %p139
        %p350 = pneg %p170
        %p351 = pneg %p167
        %s352 = sand.u32 %s157, 1
        %s353 = scalar_lea.sflag [#allocation4], %s352
        %s354 = sand.u32 %s157, 1
        %s355 = smul.addr %s354, 32
        %s356 = scalar_lea.vmem [#allocation8], %s355
        %p357 = pneg %p198
        %p358 = pneg %p195
        %s359 = sand.u32 %s185, 1
        %s360 = scalar_lea.sflag [#allocation10], %s359
        %s361 = sand.u32 %s185, 1
        %s362 = smul.addr %s361, 32
        %s363 = scalar_lea.vmem [#allocation9], %s362
        %s364 = smul.u32 4, %s33
        %s365 = smul.u32 4, %s33
        %s366 = smul.u32 4, %s33
        %s367 = smul.u32 4, %s33
        %p368 = scmp.lt.s32.totalorder %s367, 7
        %s369 = scalar_select %p368, %s367, 7
        %s370 = scalar_lea.vmem %s3, %s369
        %s371 = smul.u32 4, %s33
        %s372 = smul.u32 4, %s33
        %s373 = smul.u32 4, %s33
        %v374 = vld [vmem:[%s300] sm:$0xff]
        %v375 = vld [vmem:[%s300 + $0x8] sm:$0xff]
        %v376 = vld [vmem:[%s300 + $0x10] sm:$0xff]
        %v377 = vld [vmem:[%s300 + $0x18] sm:$0xff]
        %v378 = vld [vmem:[%s309] sm:$0xff]
        %v379 = vld [vmem:[%s309 + $0x8] sm:$0xff]
        %v380 = vld [vmem:[%s309 + $0x10] sm:$0xff]
        %v381 = vld [vmem:[%s309 + $0x18] sm:$0xff]
        %v382 = vld [vmem:[%s318] sm:$0xff]
        %v383 = vld [vmem:[%s318 + $0x8] sm:$0xff]
        %v384 = vld [vmem:[%s318 + $0x10] sm:$0xff]
        %v385 = vld [vmem:[%s318 + $0x18] sm:$0xff]
        %v386 = vmul.f32 %v374, 0.17677669
        %v387 = vmul.f32 %v375, 0.17677669
        %v388 = vmul.f32 %v376, 0.17677669
        %v389 = vmul.f32 %v377, 0.17677669
        %vm390 = vcmask 261120
        %v392 = vsel %vm390, %v386, 0
        %v395 = vsel %vm390, %v378, 0
        %397 = vmatprep.subr.mxu0 0.0
        %398 = vmatpush1.xpose.msra.mxu0 %v395
        %399 = vmatprep.subr.mxu0 0.0
        %400 = vmatpush1.xpose.msra.mxu0 0.0
        %401 = vmatprep.subr.mxu0 0.0
        %402 = vmatpush1.xpose.msra.mxu0 0.0
        %403 = vmatprep.subr.mxu0 0.0
        %404 = vmatpush1.xpose.msra.mxu0 0.0
        %405 = vmatprep.subr.mxu0 0.0
        %406 = vmatpush1.xpose.msra.mxu0 0.0
        %407 = vmatprep.subr.mxu0 0.0
        %408 = vmatpush1.xpose.msra.mxu0 0.0
        %409 = vmatprep.subr.mxu0 0.0
        %410 = vmatpush1.xpose.msra.mxu0 0.0
        %411 = vmatprep.subr.mxu0 0.0
        %412 = vmatpush1.xpose.msra.mxu0 0.0
        %413 = vmatprep.subr.mxu0 0.0
        %414 = vmatpush1.xpose.msra.mxu0 0.0
        %415 = vmatprep.subr.mxu0 0.0
        %416 = vmatpush1.xpose.msra.mxu0 0.0
        %417 = vmatprep.subr.mxu0 0.0
        %418 = vmatpush1.xpose.msra.mxu0 0.0
        %419 = vmatprep.subr.mxu0 0.0
        %420 = vmatpush1.xpose.msra.mxu0 0.0
        %421 = vmatprep.subr.mxu0 0.0
        %422 = vmatpush1.xpose.msra.mxu0 0.0
        %423 = vmatprep.subr.mxu0 0.0
        %424 = vmatpush1.xpose.msra.mxu0 0.0
        %425 = vmatprep.subr.mxu0 0.0
        %426 = vmatpush1.xpose.msra.mxu0 0.0
        %427 = vmatprep.subr.mxu0 0.0
        %428 = vmatpush1.xpose.msra.mxu0 0.0
        %429 = vmatprep.subr.mxu0 0.0
        %430 = vmatpush1.xpose.msra.mxu0 0.0
        %431 = vmatprep.subr.mxu0 0.0
        %432 = vmatpush1.xpose.msra.mxu0 0.0
        %433 = vmatprep.subr.mxu0 0.0
        %434 = vmatpush1.xpose.msra.mxu0 0.0
        %435 = vmatprep.subr.mxu0 0.0
        %436 = vmatpush1.xpose.msra.mxu0 0.0
        %437 = vmatprep.subr.mxu0 0.0
        %438 = vmatpush1.xpose.msra.mxu0 0.0
        %439 = vmatprep.subr.mxu0 0.0
        %440 = vmatpush1.xpose.msra.mxu0 0.0
        %441 = vmatprep.subr.mxu0 0.0
        %442 = vmatpush1.xpose.msra.mxu0 0.0
        %443 = vmatprep.subr.mxu0 0.0
        %444 = vmatpush1.xpose.msra.mxu0 0.0
        %445 = vmatprep.subr.mxu0 0.0
        %446 = vmatpush1.xpose.msra.mxu0 0.0
        %447 = vmatprep.subr.mxu0 0.0
        %448 = vmatpush1.xpose.msra.mxu0 0.0
        %449 = vmatprep.subr.mxu0 0.0
        %450 = vmatpush1.xpose.msra.mxu0 0.0
        %451 = vmatprep.subr.mxu0 0.0
        %452 = vmatpush1.xpose.msra.mxu0 0.0
        %453 = vmatprep.subr.mxu0 0.0
        %454 = vmatpush1.xpose.msra.mxu0 0.0
        %455 = vmatprep.subr.mxu0 0.0
        %456 = vmatpush1.xpose.msra.mxu0 0.0
        %457 = vmatprep.subr.mxu0 0.0
        %458 = vmatpush1.xpose.msra.mxu0 0.0
        %459 = vmatprep.subr.mxu0 0.0
        %460 = vmatpush1.xpose.msra.mxu0 0.0
        %461 = vmatprep.mubr.f32.mxu0 0.0
        %462 = vmatmul.mubr.f32.gmra.mrb[0].mxu0 %v392
        %v463 = vpop.f32.mrb[0].mxu0
        %v464 = vadd.f32 0.0, %v463
        %v465 = vpop.f32.mrb[0].mxu0
        %466 = vdwg.mxu0
        %v468 = vsel %vm390, %v387, 0
        %v471 = vsel %vm390, %v379, 0
        %473 = vmatprep.subr.mxu0 0.0
        %474 = vmatpush1.xpose.msra.mxu0 %v471
        %475 = vmatprep.subr.mxu0 0.0
        %476 = vmatpush1.xpose.msra.mxu0 0.0
        %477 = vmatprep.subr.mxu0 0.0
        %478 = vmatpush1.xpose.msra.mxu0 0.0
        %479 = vmatprep.subr.mxu0 0.0
        %480 = vmatpush1.xpose.msra.mxu0 0.0
        %481 = vmatprep.subr.mxu0 0.0
        %482 = vmatpush1.xpose.msra.mxu0 0.0
        %483 = vmatprep.subr.mxu0 0.0
        %484 = vmatpush1.xpose.msra.mxu0 0.0
        %485 = vmatprep.subr.mxu0 0.0
        %486 = vmatpush1.xpose.msra.mxu0 0.0
        %487 = vmatprep.subr.mxu0 0.0
        %488 = vmatpush1.xpose.msra.mxu0 0.0
        %489 = vmatprep.subr.mxu0 0.0
        %490 = vmatpush1.xpose.msra.mxu0 0.0
        %491 = vmatprep.subr.mxu0 0.0
        %492 = vmatpush1.xpose.msra.mxu0 0.0
        %493 = vmatprep.subr.mxu0 0.0
        %494 = vmatpush1.xpose.msra.mxu0 0.0
        %495 = vmatprep.subr.mxu0 0.0
        %496 = vmatpush1.xpose.msra.mxu0 0.0
        %497 = vmatprep.subr.mxu0 0.0
        %498 = vmatpush1.xpose.msra.mxu0 0.0
        %499 = vmatprep.subr.mxu0 0.0
        %500 = vmatpush1.xpose.msra.mxu0 0.0
        %501 = vmatprep.subr.mxu0 0.0
        %502 = vmatpush1.xpose.msra.mxu0 0.0
        %503 = vmatprep.subr.mxu0 0.0
        %504 = vmatpush1.xpose.msra.mxu0 0.0
        %505 = vmatprep.subr.mxu0 0.0
        %506 = vmatpush1.xpose.msra.mxu0 0.0
        %507 = vmatprep.subr.mxu0 0.0
        %508 = vmatpush1.xpose.msra.mxu0 0.0
        %509 = vmatprep.subr.mxu0 0.0
        %510 = vmatpush1.xpose.msra.mxu0 0.0
        %511 = vmatprep.subr.mxu0 0.0
        %512 = vmatpush1.xpose.msra.mxu0 0.0
        %513 = vmatprep.subr.mxu0 0.0
        %514 = vmatpush1.xpose.msra.mxu0 0.0
        %515 = vmatprep.subr.mxu0 0.0
        %516 = vmatpush1.xpose.msra.mxu0 0.0
        %517 = vmatprep.subr.mxu0 0.0
        %518 = vmatpush1.xpose.msra.mxu0 0.0
        %519 = vmatprep.subr.mxu0 0.0
        %520 = vmatpush1.xpose.msra.mxu0 0.0
        %521 = vmatprep.subr.mxu0 0.0
        %522 = vmatpush1.xpose.msra.mxu0 0.0
        %523 = vmatprep.subr.mxu0 0.0
        %524 = vmatpush1.xpose.msra.mxu0 0.0
        %525 = vmatprep.subr.mxu0 0.0
        %526 = vmatpush1.xpose.msra.mxu0 0.0
        %527 = vmatprep.subr.mxu0 0.0
        %528 = vmatpush1.xpose.msra.mxu0 0.0
        %529 = vmatprep.subr.mxu0 0.0
        %530 = vmatpush1.xpose.msra.mxu0 0.0
        %531 = vmatprep.subr.mxu0 0.0
        %532 = vmatpush1.xpose.msra.mxu0 0.0
        %533 = vmatprep.subr.mxu0 0.0
        %534 = vmatpush1.xpose.msra.mxu0 0.0
        %535 = vmatprep.subr.mxu0 0.0
        %536 = vmatpush1.xpose.msra.mxu0 0.0
        %537 = vmatprep.mubr.f32.mxu0 0.0
        %538 = vmatmul.mubr.f32.gmra.mrb[0].mxu0 %v468
        %v539 = vpop.f32.mrb[0].mxu0
        %v540 = vadd.f32 0.0, %v539
        %v541 = vpop.f32.mrb[0].mxu0
        %542 = vdwg.mxu0
        %v544 = vsel %vm390, %v388, 0
        %v547 = vsel %vm390, %v380, 0
        %549 = vmatprep.subr.mxu0 0.0
        %550 = vmatpush1.xpose.msra.mxu0 %v547
        %551 = vmatprep.subr.mxu0 0.0
        %552 = vmatpush1.xpose.msra.mxu0 0.0
        %553 = vmatprep.subr.mxu0 0.0
        %554 = vmatpush1.xpose.msra.mxu0 0.0
        %555 = vmatprep.subr.mxu0 0.0
        %556 = vmatpush1.xpose.msra.mxu0 0.0
        %557 = vmatprep.subr.mxu0 0.0
        %558 = vmatpush1.xpose.msra.mxu0 0.0
        %559 = vmatprep.subr.mxu0 0.0
        %560 = vmatpush1.xpose.msra.mxu0 0.0
        %561 = vmatprep.subr.mxu0 0.0
        %562 = vmatpush1.xpose.msra.mxu0 0.0
        %563 = vmatprep.subr.mxu0 0.0
        %564 = vmatpush1.xpose.msra.mxu0 0.0
        %565 = vmatprep.subr.mxu0 0.0
        %566 = vmatpush1.xpose.msra.mxu0 0.0
        %567 = vmatprep.subr.mxu0 0.0
        %568 = vmatpush1.xpose.msra.mxu0 0.0
        %569 = vmatprep.subr.mxu0 0.0
        %570 = vmatpush1.xpose.msra.mxu0 0.0
        %571 = vmatprep.subr.mxu0 0.0
        %572 = vmatpush1.xpose.msra.mxu0 0.0
        %573 = vmatprep.subr.mxu0 0.0
        %574 = vmatpush1.xpose.msra.mxu0 0.0
        %575 = vmatprep.subr.mxu0 0.0
        %576 = vmatpush1.xpose.msra.mxu0 0.0
        %577 = vmatprep.subr.mxu0 0.0
        %578 = vmatpush1.xpose.msra.mxu0 0.0
        %579 = vmatprep.subr.mxu0 0.0
        %580 = vmatpush1.xpose.msra.mxu0 0.0
        %581 = vmatprep.subr.mxu0 0.0
        %582 = vmatpush1.xpose.msra.mxu0 0.0
        %583 = vmatprep.subr.mxu0 0.0
        %584 = vmatpush1.xpose.msra.mxu0 0.0
        %585 = vmatprep.subr.mxu0 0.0
        %586 = vmatpush1.xpose.msra.mxu0 0.0
        %587 = vmatprep.subr.mxu0 0.0
        %588 = vmatpush1.xpose.msra.mxu0 0.0
        %589 = vmatprep.subr.mxu0 0.0
        %590 = vmatpush1.xpose.msra.mxu0 0.0
        %591 = vmatprep.subr.mxu0 0.0
        %592 = vmatpush1.xpose.msra.mxu0 0.0
        %593 = vmatprep.subr.mxu0 0.0
        %594 = vmatpush1.xpose.msra.mxu0 0.0
        %595 = vmatprep.subr.mxu0 0.0
        %596 = vmatpush1.xpose.msra.mxu0 0.0
        %597 = vmatprep.subr.mxu0 0.0
        %598 = vmatpush1.xpose.msra.mxu0 0.0
        %599 = vmatprep.subr.mxu0 0.0
        %600 = vmatpush1.xpose.msra.mxu0 0.0
        %601 = vmatprep.subr.mxu0 0.0
        %602 = vmatpush1.xpose.msra.mxu0 0.0
        %603 = vmatprep.subr.mxu0 0.0
        %604 = vmatpush1.xpose.msra.mxu0 0.0
        %605 = vmatprep.subr.mxu0 0.0
        %606 = vmatpush1.xpose.msra.mxu0 0.0
        %607 = vmatprep.subr.mxu0 0.0
        %608 = vmatpush1.xpose.msra.mxu0 0.0
        %609 = vmatprep.subr.mxu0 0.0
        %610 = vmatpush1.xpose.msra.mxu0 0.0
        %611 = vmatprep.subr.mxu0 0.0
        %612 = vmatpush1.xpose.msra.mxu0 0.0
        %613 = vmatprep.mubr.f32.mxu0 0.0
        %614 = vmatmul.mubr.f32.gmra.mrb[0].mxu0 %v544
        %v615 = vpop.f32.mrb[0].mxu0
        %v616 = vadd.f32 0.0, %v615
        %v617 = vpop.f32.mrb[0].mxu0
        %618 = vdwg.mxu0
        %v620 = vsel %vm390, %v389, 0
        %v623 = vsel %vm390, %v381, 0
        %625 = vmatprep.subr.mxu0 0.0
        %626 = vmatpush1.xpose.msra.mxu0 %v623
        %627 = vmatprep.subr.mxu0 0.0
        %628 = vmatpush1.xpose.msra.mxu0 0.0
        %629 = vmatprep.subr.mxu0 0.0
        %630 = vmatpush1.xpose.msra.mxu0 0.0
        %631 = vmatprep.subr.mxu0 0.0
        %632 = vmatpush1.xpose.msra.mxu0 0.0
        %633 = vmatprep.subr.mxu0 0.0
        %634 = vmatpush1.xpose.msra.mxu0 0.0
        %635 = vmatprep.subr.mxu0 0.0
        %636 = vmatpush1.xpose.msra.mxu0 0.0
        %637 = vmatprep.subr.mxu0 0.0
        %638 = vmatpush1.xpose.msra.mxu0 0.0
        %639 = vmatprep.subr.mxu0 0.0
        %640 = vmatpush1.xpose.msra.mxu0 0.0
        %641 = vmatprep.subr.mxu0 0.0
        %642 = vmatpush1.xpose.msra.mxu0 0.0
        %643 = vmatprep.subr.mxu0 0.0
        %644 = vmatpush1.xpose.msra.mxu0 0.0
        %645 = vmatprep.subr.mxu0 0.0
        %646 = vmatpush1.xpose.msra.mxu0 0.0
        %647 = vmatprep.subr.mxu0 0.0
        %648 = vmatpush1.xpose.msra.mxu0 0.0
        %649 = vmatprep.subr.mxu0 0.0
        %650 = vmatpush1.xpose.msra.mxu0 0.0
        %651 = vmatprep.subr.mxu0 0.0
        %652 = vmatpush1.xpose.msra.mxu0 0.0
        %653 = vmatprep.subr.mxu0 0.0
        %654 = vmatpush1.xpose.msra.mxu0 0.0
        %655 = vmatprep.subr.mxu0 0.0
        %656 = vmatpush1.xpose.msra.mxu0 0.0
        %657 = vmatprep.subr.mxu0 0.0
        %658 = vmatpush1.xpose.msra.mxu0 0.0
        %659 = vmatprep.subr.mxu0 0.0
        %660 = vmatpush1.xpose.msra.mxu0 0.0
        %661 = vmatprep.subr.mxu0 0.0
        %662 = vmatpush1.xpose.msra.mxu0 0.0
        %663 = vmatprep.subr.mxu0 0.0
        %664 = vmatpush1.xpose.msra.mxu0 0.0
        %665 = vmatprep.subr.mxu0 0.0
        %666 = vmatpush1.xpose.msra.mxu0 0.0
        %667 = vmatprep.subr.mxu0 0.0
        %668 = vmatpush1.xpose.msra.mxu0 0.0
        %669 = vmatprep.subr.mxu0 0.0
        %670 = vmatpush1.xpose.msra.mxu0 0.0
        %671 = vmatprep.subr.mxu0 0.0
        %672 = vmatpush1.xpose.msra.mxu0 0.0
        %673 = vmatprep.subr.mxu0 0.0
        %674 = vmatpush1.xpose.msra.mxu0 0.0
        %675 = vmatprep.subr.mxu0 0.0
        %676 = vmatpush1.xpose.msra.mxu0 0.0
        %677 = vmatprep.subr.mxu0 0.0
        %678 = vmatpush1.xpose.msra.mxu0 0.0
        %679 = vmatprep.subr.mxu0 0.0
        %680 = vmatpush1.xpose.msra.mxu0 0.0
        %681 = vmatprep.subr.mxu0 0.0
        %682 = vmatpush1.xpose.msra.mxu0 0.0
        %683 = vmatprep.subr.mxu0 0.0
        %684 = vmatpush1.xpose.msra.mxu0 0.0
        %685 = vmatprep.subr.mxu0 0.0
        %686 = vmatpush1.xpose.msra.mxu0 0.0
        %687 = vmatprep.subr.mxu0 0.0
        %688 = vmatpush1.xpose.msra.mxu0 0.0
        %689 = vmatprep.mubr.f32.mxu0 0.0
        %690 = vmatmul.mubr.f32.gmra.mrb[0].mxu0 %v620
        %v691 = vpop.f32.mrb[0].mxu0
        %v692 = vadd.f32 0.0, %v691
        %v693 = vpop.f32.mrb[0].mxu0
        %694 = vdwg.mxu0
        %v695 = vld [vmem:[%s370] sm:$0x1]
        %v696 = vld [vmem:[%s370 + $0x1] sm:$0x1]
        %v697 = vld [vmem:[%s370 + $0x2] sm:$0x1]
        %v698 = vld [vmem:[%s370 + $0x3] sm:$0x1]
        %v699 = vunpack.c.0.s8 %v695
        %v700 = vunpack.c.0.s8 %v696
        %v701 = vunpack.c.0.s8 %v697
        %v702 = vunpack.c.0.s8 %v698
        %vm703 = vcmp.eq.s32.totalorder %v699, 0
        %vm704 = vcmp.eq.s32.totalorder %v700, 0
        %vm705 = vcmp.eq.s32.totalorder %v701, 0
        %vm706 = vcmp.eq.s32.totalorder %v702, 0
        %v707 = vsel %vm703, 1, 0
        %v708 = vsel %vm704, 1, 0
        %v709 = vsel %vm705, 1, 0
        %v710 = vsel %vm706, 1, 0
        %v711 = vlaneseq
        %v712 = vshrl.u32 %v711, 7
        %v713 = vsub.s32 0, %v712
        %v714 = vrot.slane %v707, %v713
        %v715 = vlaneseq
        %v716 = vshrl.u32 %v715, 7
        %v717 = vsub.s32 0, %v716
        %v718 = vrot.slane %v708, %v717
        %v719 = vlaneseq
        %v720 = vshrl.u32 %v719, 7
        %v721 = vsub.s32 0, %v720
        %v722 = vrot.slane %v709, %v721
        %v723 = vlaneseq
        %v724 = vshrl.u32 %v723, 7
        %v725 = vsub.s32 0, %v724
        %v726 = vrot.slane %v710, %v725
        %vm727 = vcmp.eq.s32.totalorder %v714, 1
        %vm728 = vcmp.eq.s32.totalorder %v718, 1
        %vm729 = vcmp.eq.s32.totalorder %v722, 1
        %vm730 = vcmp.eq.s32.totalorder %v726, 1
        %v731 = vsel %vm727, -1e+09, %v464
        %v732 = vsel %vm728, -1e+09, %v540
        %v733 = vsel %vm729, -1e+09, %v616
        %v734 = vsel %vm730, -1e+09, %v692
        %vm735 = vcmask 64512
        %v736 = vsel %vm735, %v731, -inf
        %737 = vmax.xlane.f32.xlu0 %v736
        %v738 = vpop.xlane.xlu0 %737
        %v739 = vsel %vm735, %v732, -inf
        %740 = vmax.xlane.f32.xlu0 %v739
        %v741 = vpop.xlane.xlu0 %740
        %v742 = vsel %vm735, %v733, -inf
        %743 = vmax.xlane.f32.xlu0 %v742
        %v744 = vpop.xlane.xlu0 %743
        %v745 = vsel %vm735, %v734, -inf
        %746 = vmax.xlane.f32.xlu0 %v745
        %v747 = vpop.xlane.xlu0 %746
        %v748 = vsub.f32 %v731, %v738
        %v749 = vsub.f32 %v732, %v741
        %v750 = vsub.f32 %v733, %v744
        %v751 = vsub.f32 %v734, %v747
        %v752 = vmul.f32 %v748, 1.442695
        %v753 = vpow.pop %v752
        %v754 = vmul.f32 %v749, 1.442695
        %v755 = vpow.pop %v754
        %v756 = vmul.f32 %v750, 1.442695
        %v757 = vpow.pop %v756
        %v758 = vmul.f32 %v751, 1.442695
        %v759 = vpow.pop %v758
        %v760 = vsel %vm735, %v753, 0.0
        %761 = vadd.xlane.f32.xlu0 %v760
        %v762 = vpop.xlane.xlu0 %761
        %v763 = vsel %vm735, %v755, 0.0
        %764 = vadd.xlane.f32.xlu0 %v763
        %v765 = vpop.xlane.xlu0 %764
        %v766 = vsel %vm735, %v757, 0.0
        %767 = vadd.xlane.f32.xlu0 %v766
        %v768 = vpop.xlane.xlu0 %767
        %v769 = vsel %vm735, %v759, 0.0
        %770 = vadd.xlane.f32.xlu0 %v769
        %v771 = vpop.xlane.xlu0 %770
        %v772 = vrcp.pop %v762
        %v773 = vrcp.pop %v765
        %v774 = vrcp.pop %v768
        %v775 = vrcp.pop %v771
        %v776 = vmul.f32 %v753, %v772
        %v777 = vmul.f32 %v755, %v773
        %v778 = vmul.f32 %v757, %v774
        %v779 = vmul.f32 %v759, %v775
        %v781 = vsel %vm735, %v776, 0
        %783 = vmatprep.subr.mxu0 0.0
        %784 = vmatpush1.msra.mxu0 %v382
        %785 = vmatprep.subr.mxu0 0.0
        %786 = vmatpush1.msra.mxu0 0.0
        %787 = vmatprep.subr.mxu0 0.0
        %788 = vmatpush1.msra.mxu0 0.0
        %789 = vmatprep.subr.mxu0 0.0
        %790 = vmatpush1.msra.mxu0 0.0
        %791 = vmatprep.subr.mxu0 0.0
        %792 = vmatpush1.msra.mxu0 0.0
        %793 = vmatprep.subr.mxu0 0.0
        %794 = vmatpush1.msra.mxu0 0.0
        %795 = vmatprep.subr.mxu0 0.0
        %796 = vmatpush1.msra.mxu0 0.0
        %797 = vmatprep.subr.mxu0 0.0
        %798 = vmatpush1.msra.mxu0 0.0
        %799 = vmatprep.subr.mxu0 0.0
        %800 = vmatpush1.msra.mxu0 0.0
        %801 = vmatprep.subr.mxu0 0.0
        %802 = vmatpush1.msra.mxu0 0.0
        %803 = vmatprep.subr.mxu0 0.0
        %804 = vmatpush1.msra.mxu0 0.0
        %805 = vmatprep.subr.mxu0 0.0
        %806 = vmatpush1.msra.mxu0 0.0
        %807 = vmatprep.subr.mxu0 0.0
        %808 = vmatpush1.msra.mxu0 0.0
        %809 = vmatprep.subr.mxu0 0.0
        %810 = vmatpush1.msra.mxu0 0.0
        %811 = vmatprep.subr.mxu0 0.0
        %812 = vmatpush1.msra.mxu0 0.0
        %813 = vmatprep.subr.mxu0 0.0
        %814 = vmatpush1.msra.mxu0 0.0
        %815 = vmatprep.subr.mxu0 0.0
        %816 = vmatpush1.msra.mxu0 0.0
        %817 = vmatprep.subr.mxu0 0.0
        %818 = vmatpush1.msra.mxu0 0.0
        %819 = vmatprep.subr.mxu0 0.0
        %820 = vmatpush1.msra.mxu0 0.0
        %821 = vmatprep.subr.mxu0 0.0
        %822 = vmatpush1.msra.mxu0 0.0
        %823 = vmatprep.subr.mxu0 0.0
        %824 = vmatpush1.msra.mxu0 0.0
        %825 = vmatprep.subr.mxu0 0.0
        %826 = vmatpush1.msra.mxu0 0.0
        %827 = vmatprep.subr.mxu0 0.0
        %828 = vmatpush1.msra.mxu0 0.0
        %829 = vmatprep.subr.mxu0 0.0
        %830 = vmatpush1.msra.mxu0 0.0
        %831 = vmatprep.subr.mxu0 0.0
        %832 = vmatpush1.msra.mxu0 0.0
        %833 = vmatprep.subr.mxu0 0.0
        %834 = vmatpush1.msra.mxu0 0.0
        %835 = vmatprep.subr.mxu0 0.0
        %836 = vmatpush1.msra.mxu0 0.0
        %837 = vmatprep.subr.mxu0 0.0
        %838 = vmatpush1.msra.mxu0 0.0
        %839 = vmatprep.subr.mxu0 0.0
        %840 = vmatpush1.msra.mxu0 0.0
        %841 = vmatprep.subr.mxu0 0.0
        %842 = vmatpush1.msra.mxu0 0.0
        %843 = vmatprep.subr.mxu0 0.0
        %844 = vmatpush1.msra.mxu0 0.0
        %845 = vmatprep.subr.mxu0 0.0
        %846 = vmatpush1.msra.mxu0 0.0
        %847 = vmatprep.mubr.f32.mxu0 0.0
        %848 = vmatmul.mubr.f32.gmra.mrb[0].mxu0 %v781
        %v849 = vpop.f32.mrb[0].mxu0
        %v850 = vadd.f32 0.0, %v849
        %v851 = vpop.f32.mrb[0].mxu0
        %852 = vdwg.mxu0
        %v854 = vsel %vm735, %v777, 0
        %856 = vmatprep.subr.mxu0 0.0
        %857 = vmatpush1.msra.mxu0 %v383
        %858 = vmatprep.subr.mxu0 0.0
        %859 = vmatpush1.msra.mxu0 0.0
        %860 = vmatprep.subr.mxu0 0.0
        %861 = vmatpush1.msra.mxu0 0.0
        %862 = vmatprep.subr.mxu0 0.0
        %863 = vmatpush1.msra.mxu0 0.0
        %864 = vmatprep.subr.mxu0 0.0
        %865 = vmatpush1.msra.mxu0 0.0
        %866 = vmatprep.subr.mxu0 0.0
        %867 = vmatpush1.msra.mxu0 0.0
        %868 = vmatprep.subr.mxu0 0.0
        %869 = vmatpush1.msra.mxu0 0.0
        %870 = vmatprep.subr.mxu0 0.0
        %871 = vmatpush1.msra.mxu0 0.0
        %872 = vmatprep.subr.mxu0 0.0
        %873 = vmatpush1.msra.mxu0 0.0
        %874 = vmatprep.subr.mxu0 0.0
        %875 = vmatpush1.msra.mxu0 0.0
        %876 = vmatprep.subr.mxu0 0.0
        %877 = vmatpush1.msra.mxu0 0.0
        %878 = vmatprep.subr.mxu0 0.0
        %879 = vmatpush1.msra.mxu0 0.0
        %880 = vmatprep.subr.mxu0 0.0
        %881 = vmatpush1.msra.mxu0 0.0
        %882 = vmatprep.subr.mxu0 0.0
        %883 = vmatpush1.msra.mxu0 0.0
        %884 = vmatprep.subr.mxu0 0.0
        %885 = vmatpush1.msra.mxu0 0.0
        %886 = vmatprep.subr.mxu0 0.0
        %887 = vmatpush1.msra.mxu0 0.0
        %888 = vmatprep.subr.mxu0 0.0
        %889 = vmatpush1.msra.mxu0 0.0
        %890 = vmatprep.subr.mxu0 0.0
        %891 = vmatpush1.msra.mxu0 0.0
        %892 = vmatprep.subr.mxu0 0.0
        %893 = vmatpush1.msra.mxu0 0.0
        %894 = vmatprep.subr.mxu0 0.0
        %895 = vmatpush1.msra.mxu0 0.0
        %896 = vmatprep.subr.mxu0 0.0
        %897 = vmatpush1.msra.mxu0 0.0
        %898 = vmatprep.subr.mxu0 0.0
        %899 = vmatpush1.msra.mxu0 0.0
        %900 = vmatprep.subr.mxu0 0.0
        %901 = vmatpush1.msra.mxu0 0.0
        %902 = vmatprep.subr.mxu0 0.0
        %903 = vmatpush1.msra.mxu0 0.0
        %904 = vmatprep.subr.mxu0 0.0
        %905 = vmatpush1.msra.mxu0 0.0
        %906 = vmatprep.subr.mxu0 0.0
        %907 = vmatpush1.msra.mxu0 0.0
        %908 = vmatprep.subr.mxu0 0.0
        %909 = vmatpush1.msra.mxu0 0.0
        %910 = vmatprep.subr.mxu0 0.0
        %911 = vmatpush1.msra.mxu0 0.0
        %912 = vmatprep.subr.mxu0 0.0
        %913 = vmatpush1.msra.mxu0 0.0
        %914 = vmatprep.subr.mxu0 0.0
        %915 = vmatpush1.msra.mxu0 0.0
        %916 = vmatprep.subr.mxu0 0.0
        %917 = vmatpush1.msra.mxu0 0.0
        %918 = vmatprep.subr.mxu0 0.0
        %919 = vmatpush1.msra.mxu0 0.0
        %920 = vmatprep.mubr.f32.mxu0 0.0
        %921 = vmatmul.mubr.f32.gmra.mrb[0].mxu0 %v854
        %v922 = vpop.f32.mrb[0].mxu0
        %v923 = vadd.f32 0.0, %v922
        %v924 = vpop.f32.mrb[0].mxu0
        %925 = vdwg.mxu0
        %v927 = vsel %vm735, %v778, 0
        %929 = vmatprep.subr.mxu0 0.0
        %930 = vmatpush1.msra.mxu0 %v384
        %931 = vmatprep.subr.mxu0 0.0
        %932 = vmatpush1.msra.mxu0 0.0
        %933 = vmatprep.subr.mxu0 0.0
        %934 = vmatpush1.msra.mxu0 0.0
        %935 = vmatprep.subr.mxu0 0.0
        %936 = vmatpush1.msra.mxu0 0.0
        %937 = vmatprep.subr.mxu0 0.0
        %938 = vmatpush1.msra.mxu0 0.0
        %939 = vmatprep.subr.mxu0 0.0
        %940 = vmatpush1.msra.mxu0 0.0
        %941 = vmatprep.subr.mxu0 0.0
        %942 = vmatpush1.msra.mxu0 0.0
        %943 = vmatprep.subr.mxu0 0.0
        %944 = vmatpush1.msra.mxu0 0.0
        %945 = vmatprep.subr.mxu0 0.0
        %946 = vmatpush1.msra.mxu0 0.0
        %947 = vmatprep.subr.mxu0 0.0
        %948 = vmatpush1.msra.mxu0 0.0
        %949 = vmatprep.subr.mxu0 0.0
        %950 = vmatpush1.msra.mxu0 0.0
        %951 = vmatprep.subr.mxu0 0.0
        %952 = vmatpush1.msra.mxu0 0.0
        %953 = vmatprep.subr.mxu0 0.0
        %954 = vmatpush1.msra.mxu0 0.0
        %955 = vmatprep.subr.mxu0 0.0
        %956 = vmatpush1.msra.mxu0 0.0
        %957 = vmatprep.subr.mxu0 0.0
        %958 = vmatpush1.msra.mxu0 0.0
        %959 = vmatprep.subr.mxu0 0.0
        %960 = vmatpush1.msra.mxu0 0.0
        %961 = vmatprep.subr.mxu0 0.0
        %962 = vmatpush1.msra.mxu0 0.0
        %963 = vmatprep.subr.mxu0 0.0
        %964 = vmatpush1.msra.mxu0 0.0
        %965 = vmatprep.subr.mxu0 0.0
        %966 = vmatpush1.msra.mxu0 0.0
        %967 = vmatprep.subr.mxu0 0.0
        %968 = vmatpush1.msra.mxu0 0.0
        %969 = vmatprep.subr.mxu0 0.0
        %970 = vmatpush1.msra.mxu0 0.0
        %971 = vmatprep.subr.mxu0 0.0
        %972 = vmatpush1.msra.mxu0 0.0
        %973 = vmatprep.subr.mxu0 0.0
        %974 = vmatpush1.msra.mxu0 0.0
        %975 = vmatprep.subr.mxu0 0.0
        %976 = vmatpush1.msra.mxu0 0.0
        %977 = vmatprep.subr.mxu0 0.0
        %978 = vmatpush1.msra.mxu0 0.0
        %979 = vmatprep.subr.mxu0 0.0
        %980 = vmatpush1.msra.mxu0 0.0
        %981 = vmatprep.subr.mxu0 0.0
        %982 = vmatpush1.msra.mxu0 0.0
        %983 = vmatprep.subr.mxu0 0.0
        %984 = vmatpush1.msra.mxu0 0.0
        %985 = vmatprep.subr.mxu0 0.0
        %986 = vmatpush1.msra.mxu0 0.0
        %987 = vmatprep.subr.mxu0 0.0
        %988 = vmatpush1.msra.mxu0 0.0
        %989 = vmatprep.subr.mxu0 0.0
        %990 = vmatpush1.msra.mxu0 0.0
        %991 = vmatprep.subr.mxu0 0.0
        %992 = vmatpush1.msra.mxu0 0.0
        %993 = vmatprep.mubr.f32.mxu0 0.0
        %994 = vmatmul.mubr.f32.gmra.mrb[0].mxu0 %v927
        %v995 = vpop.f32.mrb[0].mxu0
        %v996 = vadd.f32 0.0, %v995
        %v997 = vpop.f32.mrb[0].mxu0
        %998 = vdwg.mxu0
        %v1000 = vsel %vm735, %v779, 0
        %1002 = vmatprep.subr.mxu0 0.0
        %1003 = vmatpush1.msra.mxu0 %v385
        %1004 = vmatprep.subr.mxu0 0.0
        %1005 = vmatpush1.msra.mxu0 0.0
        %1006 = vmatprep.subr.mxu0 0.0
        %1007 = vmatpush1.msra.mxu0 0.0
        %1008 = vmatprep.subr.mxu0 0.0
        %1009 = vmatpush1.msra.mxu0 0.0
        %1010 = vmatprep.subr.mxu0 0.0
        %1011 = vmatpush1.msra.mxu0 0.0
        %1012 = vmatprep.subr.mxu0 0.0
        %1013 = vmatpush1.msra.mxu0 0.0
        %1014 = vmatprep.subr.mxu0 0.0
        %1015 = vmatpush1.msra.mxu0 0.0
        %1016 = vmatprep.subr.mxu0 0.0
        %1017 = vmatpush1.msra.mxu0 0.0
        %1018 = vmatprep.subr.mxu0 0.0
        %1019 = vmatpush1.msra.mxu0 0.0
        %1020 = vmatprep.subr.mxu0 0.0
        %1021 = vmatpush1.msra.mxu0 0.0
        %1022 = vmatprep.subr.mxu0 0.0
        %1023 = vmatpush1.msra.mxu0 0.0
        %1024 = vmatprep.subr.mxu0 0.0
        %1025 = vmatpush1.msra.mxu0 0.0
        %1026 = vmatprep.subr.mxu0 0.0
        %1027 = vmatpush1.msra.mxu0 0.0
        %1028 = vmatprep.subr.mxu0 0.0
        %1029 = vmatpush1.msra.mxu0 0.0
        %1030 = vmatprep.subr.mxu0 0.0
        %1031 = vmatpush1.msra.mxu0 0.0
        %1032 = vmatprep.subr.mxu0 0.0
        %1033 = vmatpush1.msra.mxu0 0.0
        %1034 = vmatprep.subr.mxu0 0.0
        %1035 = vmatpush1.msra.mxu0 0.0
        %1036 = vmatprep.subr.mxu0 0.0
        %1037 = vmatpush1.msra.mxu0 0.0
        %1038 = vmatprep.subr.mxu0 0.0
        %1039 = vmatpush1.msra.mxu0 0.0
        %1040 = vmatprep.subr.mxu0 0.0
        %1041 = vmatpush1.msra.mxu0 0.0
        %1042 = vmatprep.subr.mxu0 0.0
        %1043 = vmatpush1.msra.mxu0 0.0
        %1044 = vmatprep.subr.mxu0 0.0
        %1045 = vmatpush1.msra.mxu0 0.0
        %1046 = vmatprep.subr.mxu0 0.0
        %1047 = vmatpush1.msra.mxu0 0.0
        %1048 = vmatprep.subr.mxu0 0.0
        %1049 = vmatpush1.msra.mxu0 0.0
        %1050 = vmatprep.subr.mxu0 0.0
        %1051 = vmatpush1.msra.mxu0 0.0
        %1052 = vmatprep.subr.mxu0 0.0
        %1053 = vmatpush1.msra.mxu0 0.0
        %1054 = vmatprep.subr.mxu0 0.0
        %1055 = vmatpush1.msra.mxu0 0.0
        %1056 = vmatprep.subr.mxu0 0.0
        %1057 = vmatpush1.msra.mxu0 0.0
        %1058 = vmatprep.subr.mxu0 0.0
        %1059 = vmatpush1.msra.mxu0 0.0
        %1060 = vmatprep.subr.mxu0 0.0
        %1061 = vmatpush1.msra.mxu0 0.0
        %1062 = vmatprep.subr.mxu0 0.0
        %1063 = vmatpush1.msra.mxu0 0.0
        %1064 = vmatprep.subr.mxu0 0.0
        %1065 = vmatpush1.msra.mxu0 0.0
        %1066 = vmatprep.mubr.f32.mxu0 0.0
        %1067 = vmatmul.mubr.f32.gmra.mrb[0].mxu0 %v1000
        %v1068 = vpop.f32.mrb[0].mxu0
        %v1069 = vadd.f32 0.0, %v1068
        %v1070 = vpop.f32.mrb[0].mxu0
        %1071 = vdwg.mxu0
        %1072 = vst.msk [vmem:[%s356] sm:$0xff] %vm390, %v850
        %1073 = vst.msk [vmem:[%s356 + $0x8] sm:$0xff] %vm390, %v923
        %1074 = vst.msk [vmem:[%s356 + $0x10] sm:$0xff] %vm390, %v996
        %1075 = vst.msk [vmem:[%s356 + $0x18] sm:$0xff] %vm390, %v1069
        %1076 = vst.msk [vmem:[%s363] sm:$0xff] %vm735, %v776
        %1077 = vst.msk [vmem:[%s363 + $0x8] sm:$0xff] %vm735, %v777
        %1078 = vst.msk [vmem:[%s363 + $0x10] sm:$0xff] %vm735, %v778
        %1079 = vst.msk [vmem:[%s363 + $0x18] sm:$0xff] %vm735, %v779
        %s1080 = sand.u32 %s157, 1
        %s1081 = scalar_lea.sflag [#allocation4], %s1080
        %s1082 = sand.u32 %s157, 1
        %s1083 = smul.addr %s1082, 32
        %s1084 = scalar_lea.vmem [#allocation8], %s1083
        %s1085 = sand.u32 %s185, 1
        %s1086 = scalar_lea.sflag [#allocation10], %s1085
        %s1087 = sand.u32 %s185, 1
        %s1088 = smul.addr %s1087, 32
        %s1089 = scalar_lea.vmem [#allocation9], %s1088
        // Predicated region
        $region49: #{tpu_custom_call.1} parent=35 // pred_check
          %p1090 = pneg %p167
        $region50: #{tpu_custom_call.1} parent=35 // pred_check_branch
          %1092 = sbr.rel (%p1090) target = $region52
        $region51: #{tpu_custom_call.1} parent=35 // pred_region
          %s1093 = smul.u32 4, %s33
          %s1095 = ssub.s32 512, 512
          %1096 = vsyncadd %s1081, %s1095
          %s1097 = sadd.s32 %s34, %s1093
          %s1098 = smul.addr %s1097, 128
          %s1099 = scalar_lea.hbm %s4, %s1098
          %s1100 = sshll.u32 %s1084, 4
          %s1101 = int_to_ptr.vmem [resolvable:$true] %s1100
          %1106 = dma.vmem_to_hbm [thread:$0]  %s1101, 512, %s1099, %s1081, 128, 128, 8
        $region52: #{tpu_custom_call.1} parent=35 // pred_fallthru
          _
        // Predicated region
        $region53: #{tpu_custom_call.1} parent=35 // pred_check
          %p1107 = pneg %p195
        $region54: #{tpu_custom_call.1} parent=35 // pred_check_branch
          %1109 = sbr.rel (%p1107) target = $region56
        $region55: #{tpu_custom_call.1} parent=35 // pred_region
          %s1110 = smul.u32 4, %s33
          %s1112 = ssub.s32 512, 512
          %1113 = vsyncadd %s1086, %s1112
          %s1114 = sadd.s32 %s34, %s1110
          %s1115 = smul.addr %s1114, 128
          %s1116 = scalar_lea.hbm %s5, %s1115
          %s1117 = sshll.u32 %s1089, 4
          %s1118 = int_to_ptr.vmem [resolvable:$true] %s1117
          %1123 = dma.vmem_to_hbm [thread:$0]  %s1118, 512, %s1116, %s1086, 128, 128, 8
        $region56: #{tpu_custom_call.1} parent=35 // pred_fallthru
          _
      $region36: #{tpu_custom_call.1} parent=5 // pred_fallthru
        _
      %p1124 = scmp.le.s32.totalorder 2, %s24
      // Predicated region
      $region57: #{tpu_custom_call.1} parent=5 // pred_check
        %p1125 = pneg %p1124
      $region58: #{tpu_custom_call.1} parent=5 // pred_check_branch
        %1127 = sbr.rel (%p1125) target = $region60
      $region59: #{tpu_custom_call.1} parent=5 // pred_region
        %s1128 = ssub.s32 %s24, 2
        // Predicated region
        $region61: #{tpu_custom_call.1} parent=59 // pred_check
          %p1129 = pneg %p173
        $region62: #{tpu_custom_call.1} parent=59 // pred_check_branch
          %1131 = sbr.rel (%p1129) target = $region64
        $region63: #{tpu_custom_call.1} parent=59 // pred_region
          %s1132 = sand.u32 %s158, 1
          %s1133 = scalar_lea.sflag [#allocation4], %s1132
          %s1134 = sand.u32 %s158, 1
          %s1135 = smul.addr %s1134, 32
          %s1136 = scalar_lea.vmem [#allocation8], %s1135
          %1137 = dma.done %s1133, 512
        $region64: #{tpu_custom_call.1} parent=59 // pred_fallthru
          _
        // Predicated region
        $region65: #{tpu_custom_call.1} parent=59 // pred_check
          %p1138 = pneg %p201
        $region66: #{tpu_custom_call.1} parent=59 // pred_check_branch
          %1140 = sbr.rel (%p1138) target = $region68
        $region67: #{tpu_custom_call.1} parent=59 // pred_region
          %s1141 = sand.u32 %s186, 1
          %s1142 = scalar_lea.sflag [#allocation10], %s1141
          %s1143 = sand.u32 %s186, 1
          %s1144 = smul.addr %s1143, 32
          %s1145 = scalar_lea.vmem [#allocation9], %s1144
          %1146 = dma.done %s1142, 512
        $region68: #{tpu_custom_call.1} parent=59 // pred_fallthru
          _
      $region60: #{tpu_custom_call.1} parent=5 // pred_fallthru
        _
    $region6: #{tpu_custom_call.1} parent=1 // loop_footer
      %s28 = sadd.s32 1, %s24
    $region7: #{tpu_custom_call.1} parent=1 // loop_footer_branch
      %23 = sbr.rel target = $region3
    $region8: #{tpu_custom_call.1} parent=1 // loop_exit
      _
    %1147 = vsyncpa [#allocation3], 1
    %s1148 = scalar_lea.sflag [#allocation3], 1
    %1149 = vsyncpa %s1148, 1
    %1150 = vsyncpa [#allocation6], 1
    %s1151 = scalar_lea.sflag [#allocation6], 1
    %1152 = vsyncpa %s1151, 1
    %1153 = vsyncpa [#allocation4], 1
    %s1154 = scalar_lea.sflag [#allocation4], 1
    %1155 = vsyncpa %s1154, 1
    %1156 = vsyncpa [#allocation10], 1
    %s1157 = scalar_lea.sflag [#allocation10], 1
    %1158 = vsyncpa %s1157, 1

</llo_original>
